<compile_context>
chip_gen: v5e
topology: v5e:2x2
jax: 0.10.0
libtpu: 0.0.40
codegen_flags: <defaults>
</compile_context>

<pallas_src>
import math
import functools

import jax
import jax.numpy as jnp
from jax.experimental import pallas as pl
from jax.experimental.pallas import tpu as pltpu


# ----------------------------- config ---------------------------------------
D_MODEL = 32
HEAD_SIZE = 8
NUM_HEADS = 4            # num_heads * head_size == d_model (required by Wo shape)
CONTEXT_LENGTH = 16
DEPTH = 0
LN_EPS = 1e-5

B = 2
T = 16                   # T <= CONTEXT_LENGTH

NSEG = 2 * NUM_HEADS                 # head/branch segments (q1,q2 per head) = 8
LANE = NSEG * T                      # packed score-slab width = 128 (one lane tile)
WIDE = NUM_HEADS * 2 * HEAD_SIZE     # real projection columns = 64
MASK_VALUE = -1e30                   # additive causal mask (exp underflows to 0)


def lambda_init_fn(depth):
    depth = depth + 1
    return 0.8 - 0.6 * math.exp(-0.3 * depth)


LAMBDA_INIT = lambda_init_fn(DEPTH)
POST_SCALE = 1.0 - LAMBDA_INIT       # applied after LN / concat in the reference


# ----------------------------- kernel ----------------------------------------
def mha_diff_kernel(x_ref, wqkv_ref, segmul_ref, rowc_ref, sqc_ref, wo_ref,
                    wob_ref, out_ref, *, batch, seq, lane):
    """Single invocation: whole problem resident in VMEM (no grid)."""
    f32 = jnp.float32
    xf = x_ref[...]                                                    # (B*T, C)

    # One wide projection for q|k|v of all heads (1/sqrt(hs) folded into Wq).
    proj = jnp.dot(xf, wqkv_ref[...], preferred_element_type=f32)      # (B*T, 3*lane)

    causal = rowc_ref[0:seq, :]                                        # (T, lane) additive mask
    rrep = rowc_ref[seq:2 * seq, :]                                    # (T, lane): [u,c] = (c%T==u)
    segmul = segmul_ref[...]                                           # (1, lane): +1 / -lambda_h

    kbd_mask = sqc_ref[:, 0:lane]                                      # (lane, lane) block-diag masks
    vbd_mask = sqc_ref[:, lane:2 * lane]
    den_ones = sqc_ref[:, 2 * lane:3 * lane]                           # segment-sum ones (width T)
    ln_ones = sqc_ref[:, 3 * lane:4 * lane]                            # segment-mean (width 2*hs, /2hs)

    outs = []
    for b in range(batch):                                             # unrolled, B = 2
        r0 = b * seq
        qb = proj[r0:r0 + seq, 0:lane]                                 # (T, lane)
        kb = proj[r0:r0 + seq, lane:2 * lane]                          # (T, lane)
        vb = proj[r0:r0 + seq, 2 * lane:3 * lane]                      # (T, lane)

        # Block-diagonal K: one transpose per batch element, lane-replicated on
        # the MXU via a constant replication matrix, then masked to its segment.
        kbd = jnp.dot(kb.T, rrep, preferred_element_type=f32) * kbd_mask   # (lane, lane)
        # All 8 (T,T) head/branch score matrices as one lane-dense slab.
        s = jnp.dot(qb, kbd, preferred_element_type=f32) + causal          # (T, lane)

        # Segmented softmax (global row max is valid per segment; scores are O(1)
        # here so no underflow of per-segment maxima).  Exact normalization.
        m = jnp.max(s, axis=-1, keepdims=True)
        e = jnp.exp(s - m)
        den = jnp.dot(e, den_ones, preferred_element_type=f32)             # per-segment sums
        w = (e / den) * segmul                                             # softmax1 - lam*softmax2

        # Block-diagonal V: sublane-replicated copies masked to the owning head;
        # one matmul emits all head outputs already concatenated along lanes.
        vbd = jnp.concatenate([vb] * (lane // seq), axis=0) * vbd_mask     # (lane, lane)
        outs.append(jnp.dot(w, vbd, preferred_element_type=f32))           # (T, lane)

    o = jnp.concatenate(outs, axis=0)                                      # (B*T, lane)

    # Segmented LayerNorm over each head's 2*head_size block.
    # (gamma / beta / (1 - lambda_init) are folded into Wo / its bias.)
    mu = jnp.dot(o, ln_ones, preferred_element_type=f32)
    cent = o - mu
    var = jnp.dot(cent * cent, ln_ones, preferred_element_type=f32)
    norm = cent * jax.lax.rsqrt(var + LN_EPS)

    out = jnp.dot(norm, wo_ref[...], preferred_element_type=f32) + wob_ref[...]
    out_ref[...] = out.astype(out_ref.dtype)


# ----------------------------- wrapper ----------------------------------------
def multi_head_attention(x, params):
    """x: (B, T, C) float32.  Returns (B, T, C)."""
    b, t, c = x.shape
    hs, nh = HEAD_SIZE, NUM_HEADS
    lane = NSEG * t
    assert c == D_MODEL and t <= CONTEXT_LENGTH
    assert lane == 128 and nh * 2 * hs <= lane
    # TODO(synk): generalize the lane packing (NSEG * T == 128) for other shapes.

    scale = 1.0 / math.sqrt(hs)

    def pack(w, s=1.0):
        # (nh, C, 2*hs) -> (C, nh*2*hs), head-major, then zero-pad to a lane tile.
        wp = jnp.transpose(w, (1, 0, 2)).reshape(c, nh * 2 * hs) * s
        return jnp.pad(wp, ((0, 0), (0, lane - nh * 2 * hs)))

    wqkv = jnp.concatenate([pack(params["wq"], scale),
                            pack(params["wk"]),
                            pack(params["wv"])], axis=1)                 # (C, 3*lane)

    # Per-head lambda and the per-segment combine multipliers (+1 / -lambda_h).
    lam1 = jnp.exp(jnp.sum(params["lambda_q1"] * params["lambda_k1"], axis=-1))
    lam2 = jnp.exp(jnp.sum(params["lambda_q2"] * params["lambda_k2"], axis=-1))
    lam = (lam1 - lam2 + LAMBDA_INIT).astype(jnp.float32)                # (nh,)
    seg_vals = jnp.stack([jnp.ones((nh,), jnp.float32), -lam], axis=1).reshape(NSEG)
    segmul = jnp.repeat(seg_vals, t).reshape(1, lane)

    # Row-shaped constants: additive causal mask tiled across segments + the
    # lane-replication matrix used to build the block-diagonal K.
    row = jnp.arange(t)[:, None]
    col = jnp.arange(t)[None, :]
    causal = jnp.tile(jnp.where(col <= row, 0.0, MASK_VALUE).astype(jnp.float32),
                      (1, NSEG))                                          # (T, lane)
    rrep = (jnp.arange(lane)[None, :] % t == jnp.arange(t)[:, None]).astype(jnp.float32)
    rowc = jnp.concatenate([causal, rrep], axis=0)                        # (2T, lane)

    # Square constants: block-diagonal masks / ones matrices, one stacked input.
    ridx = jnp.arange(lane)[:, None]
    cidx = jnp.arange(lane)[None, :]
    kbd_mask = (ridx // hs == cidx // t).astype(jnp.float32)
    vbd_mask = (cidx // (2 * hs) == (ridx // t) // 2).astype(jnp.float32)
    den_ones = (ridx // t == cidx // t).astype(jnp.float32)
    ln_ones = (ridx // (2 * hs) == cidx // (2 * hs)).astype(jnp.float32) / (2 * hs)
    sqc = jnp.concatenate([kbd_mask, vbd_mask, den_ones, ln_ones], axis=1)  # (lane, 4*lane)

    # Fold LN gamma/beta and (1 - lambda_init) into the output projection (exact).
    gamma_t = jnp.tile(params["ln_gamma"], nh)                            # (2*D,)
    beta_t = jnp.tile(params["ln_beta"], nh)
    wo_t = params["wo_w"].T                                               # (2*D, D)
    wo_eff = jnp.concatenate(
        [wo_t * (gamma_t * POST_SCALE)[:, None],
         jnp.zeros((lane - 2 * c, c), jnp.float32)], axis=0)              # (lane, D)
    wob_eff = (params["wo_b"] + POST_SCALE * jnp.dot(beta_t, wo_t)).reshape(1, c)

    x_flat = x.reshape(b * t, c)

    kernel = functools.partial(mha_diff_kernel, batch=b, seq=t, lane=lane)
    vmem = pl.BlockSpec(memory_space=pltpu.MemorySpace.VMEM)
    out = pl.pallas_call(
        kernel,
        out_shape=jax.ShapeDtypeStruct((b * t, c), jnp.float32),
        in_specs=[vmem] * 7,
        out_specs=vmem,
    )(x_flat, wqkv, segmul, rowc, sqc, wo_eff, wob_eff)

    # dropout_layer: identity at inference / p = 0
    return out.reshape(b, t, c)


# ----------------------------- pure-JAX reference -----------------------------
def reference(x, params):
    hs = HEAD_SIZE
    hp = jax.lax.Precision.HIGHEST
    t = x.shape[1]
    mask = jnp.tril(jnp.ones((t, t)))
    outs = []
    for h in range(NUM_HEADS):
        q = jnp.dot(x, params["wq"][h], precision=hp)
        k = jnp.dot(x, params["wk"][h], precision=hp)
        v = jnp.dot(x, params["wv"][h], precision=hp)
        q1, q2 = q[..., :hs], q[..., hs:]
        k1, k2 = k[..., :hs], k[..., hs:]
        s1 = jnp.einsum("btd,bsd->bts", q1, k1, precision=hp) * (1.0 / math.sqrt(hs))
        s2 = jnp.einsum("btd,bsd->bts", q2, k2, precision=hp) * (1.0 / math.sqrt(hs))
        s1 = jnp.where(mask == 0, -jnp.inf, s1)
        s2 = jnp.where(mask == 0, -jnp.inf, s2)
        lam1 = jnp.exp(jnp.sum(params["lambda_q1"][h] * params["lambda_k1"][h]))
        lam2 = jnp.exp(jnp.sum(params["lambda_q2"][h] * params["lambda_k2"][h]))
        lam = lam1 - lam2 + LAMBDA_INIT
        w = jax.nn.softmax(s1, axis=-1) - lam * jax.nn.softmax(s2, axis=-1)
        o = jnp.einsum("bts,bsd->btd", w, v, precision=hp)
        mu = jnp.mean(o, axis=-1, keepdims=True)
        var = jnp.mean((o - mu) ** 2, axis=-1, keepdims=True)
        o = (o - mu) / jnp.sqrt(var + LN_EPS)
        o = o * params["ln_gamma"] + params["ln_beta"]
        outs.append(o)
    y = jnp.concatenate(outs, axis=-1) * POST_SCALE
    return jnp.dot(y, params["wo_w"].T, precision=hp) + params["wo_b"]


# ----------------------------- main -------------------------------------------
if __name__ == "__main__":
    key = jax.random.PRNGKey(0)
    keys = jax.random.split(key, 12)

    hs, nh, c = HEAD_SIZE, NUM_HEADS, D_MODEL
    params = {
        "wq": jax.random.normal(keys[0], (nh, c, 2 * hs), jnp.float32) * 0.1,
        "wk": jax.random.normal(keys[1], (nh, c, 2 * hs), jnp.float32) * 0.1,
        "wv": jax.random.normal(keys[2], (nh, c, 2 * hs), jnp.float32) * 0.1,
        "lambda_q1": jax.random.normal(keys[3], (nh, hs), jnp.float32) * 0.1,
        "lambda_q2": jax.random.normal(keys[4], (nh, hs), jnp.float32) * 0.1,
        "lambda_k1": jax.random.normal(keys[5], (nh, hs), jnp.float32) * 0.1,
        "lambda_k2": jax.random.normal(keys[6], (nh, hs), jnp.float32) * 0.1,
        "ln_gamma": jax.random.normal(keys[7], (2 * hs,), jnp.float32) * 0.1 + 1.0,
        "ln_beta": jax.random.normal(keys[8], (2 * hs,), jnp.float32) * 0.1,
        "wo_w": jax.random.normal(keys[9], (c, 2 * c), jnp.float32) * 0.1,
        "wo_b": jax.random.normal(keys[10], (c,), jnp.float32) * 0.1,
    }

    x = jax.random.normal(keys[11], (B, T, c), jnp.float32)

    out = jax.block_until_ready(multi_head_attention(x, params))
    ref = jax.block_until_ready(reference(x, params))

    assert out.shape == (B, T, D_MODEL)
    # Exact (non-approx) softmax + f32 accumulation: agreement is ~1e-5 when both
    # paths do full-precision f32 matmuls.  The bound below only leaves headroom
    # for XLA's reduced-precision f32 dot modes on TPU; any semantic error
    # (mask / lambda / head order / LN / scales) would be O(0.1) or larger.
    err = float(jnp.max(jnp.abs(out - ref)))
    assert err < 2e-2, err

    print("KERNEL_OK")
</pallas_src>

<mosaic_0001>
module attributes {stable_mosaic.version = 11 : i64} {
  func.func @mha_diff_kernel(%arg0: memref<32x32xf32, #tpu.memory_space<vmem>>, %arg1: memref<32x384xf32, #tpu.memory_space<vmem>>, %arg2: memref<1x128xf32, #tpu.memory_space<vmem>>, %arg3: memref<32x128xf32, #tpu.memory_space<vmem>>, %arg4: memref<128x512xf32, #tpu.memory_space<vmem>>, %arg5: memref<128x32xf32, #tpu.memory_space<vmem>>, %arg6: memref<1x32xf32, #tpu.memory_space<vmem>>, %arg7: memref<32x32xf32, #tpu.memory_space<vmem>>) attributes {dimension_semantics = [], scalar_prefetch = 0 : i64, scratch_operands = 0 : i64, tpu.core_type = #tpu.core_type<tc>} {
    %c0 = arith.constant 0 : index
    %c0_0 = arith.constant 0 : index
    %0 = vector.load %arg0[%c0, %c0_0] : memref<32x32xf32, #tpu.memory_space<vmem>>, vector<32x32xf32>
    %c0_1 = arith.constant 0 : index
    %c0_2 = arith.constant 0 : index
    %1 = vector.load %arg1[%c0_1, %c0_2] : memref<32x384xf32, #tpu.memory_space<vmem>>, vector<32x384xf32>
    %cst = arith.constant dense<0.000000e+00> : vector<32x384xf32>
    %2 = tpu.matmul %0, %1, %cst {dimension_numbers = #tpu.dot_dimension_numbers<[1], [0], [0], [1], [0, 0, 1, 1], [], []>} : vector<32x32xf32>, vector<32x384xf32>, vector<32x384xf32> -> vector<32x384xf32>
    %c0_3 = arith.constant 0 : index
    %c0_4 = arith.constant 0 : index
    %3 = vector.load %arg3[%c0_3, %c0_4] : memref<32x128xf32, #tpu.memory_space<vmem>>, vector<16x128xf32>
    %c16 = arith.constant 16 : index
    %c0_5 = arith.constant 0 : index
    %4 = vector.load %arg3[%c16, %c0_5] : memref<32x128xf32, #tpu.memory_space<vmem>>, vector<16x128xf32>
    %c0_6 = arith.constant 0 : index
    %c0_7 = arith.constant 0 : index
    %5 = vector.load %arg2[%c0_6, %c0_7] : memref<1x128xf32, #tpu.memory_space<vmem>>, vector<1x128xf32>
    %c0_8 = arith.constant 0 : index
    %c0_9 = arith.constant 0 : index
    %6 = vector.load %arg4[%c0_8, %c0_9] : memref<128x512xf32, #tpu.memory_space<vmem>>, vector<128x128xf32>
    %c0_10 = arith.constant 0 : index
    %c128 = arith.constant 128 : index
    %7 = vector.load %arg4[%c0_10, %c128] : memref<128x512xf32, #tpu.memory_space<vmem>>, vector<128x128xf32>
    %c0_11 = arith.constant 0 : index
    %c256 = arith.constant 256 : index
    %8 = vector.load %arg4[%c0_11, %c256] : memref<128x512xf32, #tpu.memory_space<vmem>>, vector<128x128xf32>
    %c0_12 = arith.constant 0 : index
    %c384 = arith.constant 384 : index
    %9 = vector.load %arg4[%c0_12, %c384] : memref<128x512xf32, #tpu.memory_space<vmem>>, vector<128x128xf32>
    %10 = vector.extract_strided_slice %2 {offsets = [0, 0], sizes = [16, 128], strides = [1, 1]} : vector<32x384xf32> to vector<16x128xf32>
    %11 = vector.extract_strided_slice %2 {offsets = [0, 128], sizes = [16, 128], strides = [1, 1]} : vector<32x384xf32> to vector<16x128xf32>
    %12 = vector.extract_strided_slice %2 {offsets = [0, 256], sizes = [16, 128], strides = [1, 1]} : vector<32x384xf32> to vector<16x128xf32>
    %13 = tpu.transpose %11, [1, 0] : vector<16x128xf32> -> vector<128x16xf32>
    %cst_13 = arith.constant dense<0.000000e+00> : vector<128x128xf32>
    %14 = tpu.matmul %13, %4, %cst_13 {dimension_numbers = #tpu.dot_dimension_numbers<[1], [0], [0], [1], [0, 0, 1, 1], [], []>} : vector<128x16xf32>, vector<16x128xf32>, vector<128x128xf32> -> vector<128x128xf32>
    %15 = arith.mulf %14, %6 : vector<128x128xf32>
    %cst_14 = arith.constant dense<0.000000e+00> : vector<16x128xf32>
    %16 = tpu.matmul %10, %15, %cst_14 {dimension_numbers = #tpu.dot_dimension_numbers<[1], [0], [0], [1], [0, 0, 1, 1], [], []>} : vector<16x128xf32>, vector<128x128xf32>, vector<16x128xf32> -> vector<16x128xf32>
    %17 = arith.addf %16, %3 : vector<16x128xf32>
    %cst_15 = arith.constant dense<0xFF800000> : vector<16xf32>
    %18 = vector.multi_reduction <maximumf>, %17, %cst_15 [1] : vector<16x128xf32> to vector<16xf32>
    %19 = vector.shape_cast %18 : vector<16xf32> to vector<16x1xf32>
    %20 = vector.broadcast %19 : vector<16x1xf32> to vector<16x128xf32>
    %21 = arith.subf %17, %20 : vector<16x128xf32>
    %22 = math.exp %21 : vector<16x128xf32>
    %cst_16 = arith.constant dense<0.000000e+00> : vector<16x128xf32>
    %23 = tpu.matmul %22, %8, %cst_16 {dimension_numbers = #tpu.dot_dimension_numbers<[1], [0], [0], [1], [0, 0, 1, 1], [], []>} : vector<16x128xf32>, vector<128x128xf32>, vector<16x128xf32> -> vector<16x128xf32>
    %24 = arith.divf %22, %23 : vector<16x128xf32>
    %25 = vector.broadcast %5 : vector<1x128xf32> to vector<16x128xf32>
    %26 = arith.mulf %24, %25 : vector<16x128xf32>
    %27 = tpu.concatenate %12, %12, %12, %12, %12, %12, %12, %12 in 0 : vector<16x128xf32>, vector<16x128xf32>, vector<16x128xf32>, vector<16x128xf32>, vector<16x128xf32>, vector<16x128xf32>, vector<16x128xf32>, vector<16x128xf32> -> vector<128x128xf32>
    %28 = arith.mulf %27, %7 : vector<128x128xf32>
    %cst_17 = arith.constant dense<0.000000e+00> : vector<16x128xf32>
    %29 = tpu.matmul %26, %28, %cst_17 {dimension_numbers = #tpu.dot_dimension_numbers<[1], [0], [0], [1], [0, 0, 1, 1], [], []>} : vector<16x128xf32>, vector<128x128xf32>, vector<16x128xf32> -> vector<16x128xf32>
    %30 = vector.extract_strided_slice %2 {offsets = [16, 0], sizes = [16, 128], strides = [1, 1]} : vector<32x384xf32> to vector<16x128xf32>
    %31 = vector.extract_strided_slice %2 {offsets = [16, 128], sizes = [16, 128], strides = [1, 1]} : vector<32x384xf32> to vector<16x128xf32>
    %32 = vector.extract_strided_slice %2 {offsets = [16, 256], sizes = [16, 128], strides = [1, 1]} : vector<32x384xf32> to vector<16x128xf32>
    %33 = tpu.transpose %31, [1, 0] : vector<16x128xf32> -> vector<128x16xf32>
    %cst_18 = arith.constant dense<0.000000e+00> : vector<128x128xf32>
    %34 = tpu.matmul %33, %4, %cst_18 {dimension_numbers = #tpu.dot_dimension_numbers<[1], [0], [0], [1], [0, 0, 1, 1], [], []>} : vector<128x16xf32>, vector<16x128xf32>, vector<128x128xf32> -> vector<128x128xf32>
    %35 = arith.mulf %34, %6 : vector<128x128xf32>
    %cst_19 = arith.constant dense<0.000000e+00> : vector<16x128xf32>
    %36 = tpu.matmul %30, %35, %cst_19 {dimension_numbers = #tpu.dot_dimension_numbers<[1], [0], [0], [1], [0, 0, 1, 1], [], []>} : vector<16x128xf32>, vector<128x128xf32>, vector<16x128xf32> -> vector<16x128xf32>
    %37 = arith.addf %36, %3 : vector<16x128xf32>
    %cst_20 = arith.constant dense<0xFF800000> : vector<16xf32>
    %38 = vector.multi_reduction <maximumf>, %37, %cst_20 [1] : vector<16x128xf32> to vector<16xf32>
    %39 = vector.shape_cast %38 : vector<16xf32> to vector<16x1xf32>
    %40 = vector.broadcast %39 : vector<16x1xf32> to vector<16x128xf32>
    %41 = arith.subf %37, %40 : vector<16x128xf32>
    %42 = math.exp %41 : vector<16x128xf32>
    %cst_21 = arith.constant dense<0.000000e+00> : vector<16x128xf32>
    %43 = tpu.matmul %42, %8, %cst_21 {dimension_numbers = #tpu.dot_dimension_numbers<[1], [0], [0], [1], [0, 0, 1, 1], [], []>} : vector<16x128xf32>, vector<128x128xf32>, vector<16x128xf32> -> vector<16x128xf32>
    %44 = arith.divf %42, %43 : vector<16x128xf32>
    %45 = vector.broadcast %5 : vector<1x128xf32> to vector<16x128xf32>
    %46 = arith.mulf %44, %45 : vector<16x128xf32>
    %47 = tpu.concatenate %32, %32, %32, %32, %32, %32, %32, %32 in 0 : vector<16x128xf32>, vector<16x128xf32>, vector<16x128xf32>, vector<16x128xf32>, vector<16x128xf32>, vector<16x128xf32>, vector<16x128xf32>, vector<16x128xf32> -> vector<128x128xf32>
    %48 = arith.mulf %47, %7 : vector<128x128xf32>
    %cst_22 = arith.constant dense<0.000000e+00> : vector<16x128xf32>
    %49 = tpu.matmul %46, %48, %cst_22 {dimension_numbers = #tpu.dot_dimension_numbers<[1], [0], [0], [1], [0, 0, 1, 1], [], []>} : vector<16x128xf32>, vector<128x128xf32>, vector<16x128xf32> -> vector<16x128xf32>
    %50 = tpu.concatenate %29, %49 in 0 : vector<16x128xf32>, vector<16x128xf32> -> vector<32x128xf32>
    %cst_23 = arith.constant dense<0.000000e+00> : vector<32x128xf32>
    %51 = tpu.matmul %50, %9, %cst_23 {dimension_numbers = #tpu.dot_dimension_numbers<[1], [0], [0], [1], [0, 0, 1, 1], [], []>} : vector<32x128xf32>, vector<128x128xf32>, vector<32x128xf32> -> vector<32x128xf32>
    %52 = arith.subf %50, %51 : vector<32x128xf32>
    %53 = arith.mulf %52, %52 : vector<32x128xf32>
    %cst_24 = arith.constant dense<0.000000e+00> : vector<32x128xf32>
    %54 = tpu.matmul %53, %9, %cst_24 {dimension_numbers = #tpu.dot_dimension_numbers<[1], [0], [0], [1], [0, 0, 1, 1], [], []>} : vector<32x128xf32>, vector<128x128xf32>, vector<32x128xf32> -> vector<32x128xf32>
    %cst_25 = arith.constant 9.99999974E-6 : f32
    %55 = vector.broadcast %cst_25 : f32 to vector<32x128xf32>
    %56 = arith.addf %54, %55 : vector<32x128xf32>
    %57 = math.rsqrt %56 : vector<32x128xf32>
    %58 = arith.mulf %52, %57 : vector<32x128xf32>
    %c0_26 = arith.constant 0 : index
    %c0_27 = arith.constant 0 : index
    %59 = vector.load %arg5[%c0_26, %c0_27] : memref<128x32xf32, #tpu.memory_space<vmem>>, vector<128x32xf32>
    %cst_28 = arith.constant dense<0.000000e+00> : vector<32x32xf32>
    %60 = tpu.matmul %58, %59, %cst_28 {dimension_numbers = #tpu.dot_dimension_numbers<[1], [0], [0], [1], [0, 0, 1, 1], [], []>} : vector<32x128xf32>, vector<128x32xf32>, vector<32x32xf32> -> vector<32x32xf32>
    %c0_29 = arith.constant 0 : index
    %c0_30 = arith.constant 0 : index
    %61 = vector.load %arg6[%c0_29, %c0_30] : memref<1x32xf32, #tpu.memory_space<vmem>>, vector<1x32xf32>
    %62 = vector.broadcast %61 : vector<1x32xf32> to vector<32x32xf32>
    %63 = arith.addf %60, %62 : vector<32x32xf32>
    %c0_31 = arith.constant 0 : index
    %c0_32 = arith.constant 0 : index
    %64 = vector.load %arg7[%c0_31, %c0_32] : memref<32x32xf32, #tpu.memory_space<vmem>>, vector<32x32xf32>
    tpu.vector_store %arg7[%c0_31, %c0_32], %63 {strides = array<i32>} : memref<32x32xf32, #tpu.memory_space<vmem>>, vector<32x32xf32>,
    return
  }
}

</mosaic_0001>

<llo_original>
// kernel: tpu_custom_call.1
$region0: #{tpu_custom_call.1}
  #allocation0 [shape = 'u32[]', space=smem, size = 0x4, offset = 0x4, fixed_abs, tag = 'smem constant byte address 0x4 - core index']
  #allocation1 [shape = 'u32[72,128]{1,0:T(1,128)}', space=vmem, size = 0x9000, scoped, tag = 'internal scratch']
  %s0 = inlined_call_operand.vmem [shape: f32[32,32], index: 0, kind: input, shape index: {}]
  %s1 = inlined_call_operand.vmem [shape: f32[32,384], index: 1, kind: input, shape index: {}]
  %s2 = inlined_call_operand.vmem [shape: f32[1,128], index: 2, kind: input, shape index: {}]
  %s3 = inlined_call_operand.vmem [shape: f32[32,128], index: 3, kind: input, shape index: {}]
  %s4 = inlined_call_operand.hbm [shape: f32[128,512], index: 4, kind: input, shape index: {}]
  %s5 = inlined_call_operand.vmem [shape: f32[128,32], index: 5, kind: input, shape index: {}]
  %s6 = inlined_call_operand.vmem [shape: f32[1,32], index: 6, kind: input, shape index: {}]
  %s7 = inlined_call_operand.hbm [shape: f32[32,32], index: 7, kind: output, shape index: {}]
  %s8 = sld [smem:[#allocation0]]
  $region42: #{tpu_custom_call.1} parent=0
    _
  %s10 = ssub.s32 1, %s8
  %s11 = scalar_select 0, %s10, %s8
  $region1: #{tpu_custom_call.1} parent=0
    #allocation2 [shape = 'u8[262144]{0}', space=vmem, size = 0x40000, scoped, tag = 'input window, operand 4, single buffered']
    #allocation3 [shape = 's32[1]{0}', space=sflag, size = 0x4, scoped, tag = 'scoped memory for tpu_custom_call.1']
    #allocation4 [shape = 's32[1]{0}', space=sflag, size = 0x4, scoped, tag = 'scoped memory for tpu_custom_call.1']
    #allocation5 [shape = 'u8[16384]{0}', space=vmem, size = 0x4000, scoped, tag = 'output window, operand 0, single buffered']
    %12 = vsyncpa [#allocation3], 0
    %13 = vsyncpa [#allocation4], 0
    // Predicated region
    $region2: #{tpu_custom_call.1} parent=1 // pred_check
      _
    $region3: #{tpu_custom_call.1} parent=1 // pred_check_branch
      %15 = sbr.rel (0) target = $region5
    $region4: #{tpu_custom_call.1} parent=1 // pred_region
      _
    $region5: #{tpu_custom_call.1} parent=1 // pred_fallthru
      _
    // Predicated region
    $region6: #{tpu_custom_call.1} parent=1 // pred_check
      _
    $region7: #{tpu_custom_call.1} parent=1 // pred_check_branch
      %17 = sbr.rel (0) target = $region9
    $region8: #{tpu_custom_call.1} parent=1 // pred_region
      _
    $region9: #{tpu_custom_call.1} parent=1 // pred_fallthru
      _
    // Predicated region
    $region10: #{tpu_custom_call.1} parent=1 // pred_check
      _
    $region11: #{tpu_custom_call.1} parent=1 // pred_check_branch
      %19 = sbr.rel (0) target = $region13
    $region12: #{tpu_custom_call.1} parent=1 // pred_region
      _
    $region13: #{tpu_custom_call.1} parent=1 // pred_fallthru
      _
    // Predicated region
    $region14: #{tpu_custom_call.1} parent=1 // pred_check
      _
    $region15: #{tpu_custom_call.1} parent=1 // pred_check_branch
      %21 = sbr.rel (0) target = $region17
    $region16: #{tpu_custom_call.1} parent=1 // pred_region
      _
    $region17: #{tpu_custom_call.1} parent=1 // pred_fallthru
      _
    // Predicated region
    $region18: #{tpu_custom_call.1} parent=1 // pred_check
      _
    $region19: #{tpu_custom_call.1} parent=1 // pred_check_branch
      %23 = sbr.rel (0) target = $region21
    $region20: #{tpu_custom_call.1} parent=1 // pred_region
      %25 = vsyncadd [#allocation3], 0
      %s26 = sshll.u32 %s4, 4
      %s27 = int_to_ptr.hbm [resolvable:$true] %s26
      %s28 = sshll.u32 [#allocation2], 4
      %s29 = int_to_ptr.vmem [resolvable:$true] %s28
      %34 = dma.hbm_to_vmem [thread:$0]  %s27, 8192, %s29, [#allocation3], 512, 512, 32
    $region21: #{tpu_custom_call.1} parent=1 // pred_fallthru
      _
    // Predicated region
    $region22: #{tpu_custom_call.1} parent=1 // pred_check
      _
    $region23: #{tpu_custom_call.1} parent=1 // pred_check_branch
      %36 = sbr.rel (0) target = $region25
    $region24: #{tpu_custom_call.1} parent=1 // pred_region
      _
    $region25: #{tpu_custom_call.1} parent=1 // pred_fallthru
      _
    // Predicated region
    $region26: #{tpu_custom_call.1} parent=1 // pred_check
      _
    $region27: #{tpu_custom_call.1} parent=1 // pred_check_branch
      %38 = sbr.rel (0) target = $region29
    $region28: #{tpu_custom_call.1} parent=1 // pred_region
      _
    $region29: #{tpu_custom_call.1} parent=1 // pred_fallthru
      _
    // Predicated region
    $region30: #{tpu_custom_call.1} parent=1 // pred_check
      _
    $region31: #{tpu_custom_call.1} parent=1 // pred_check_branch
      %40 = sbr.rel (0) target = $region33
    $region32: #{tpu_custom_call.1} parent=1 // pred_region
      %42 = dma.done [#allocation3], 8192
    $region33: #{tpu_custom_call.1} parent=1 // pred_fallthru
      _
    %v43 = vld [vmem:[%s0] sm:$0xff]
    %v44 = vld [vmem:[%s0 + $0x8] sm:$0xff]
    %v45 = vld [vmem:[%s0 + $0x10] sm:$0xff]
    %v46 = vld [vmem:[%s0 + $0x18] sm:$0xff]
    %v47 = vld [vmem:[%s1] sm:$0xff]
    %v48 = vld [vmem:[%s1 + $0x8] sm:$0xff]
    %v49 = vld [vmem:[%s1 + $0x10] sm:$0xff]
    %v50 = vld [vmem:[%s1 + $0x18] sm:$0xff]
    %v51 = vld [vmem:[%s1 + $0x20] sm:$0xff]
    %v52 = vld [vmem:[%s1 + $0x28] sm:$0xff]
    %v53 = vld [vmem:[%s1 + $0x30] sm:$0xff]
    %v54 = vld [vmem:[%s1 + $0x38] sm:$0xff]
    %v55 = vld [vmem:[%s1 + $0x40] sm:$0xff]
    %v56 = vld [vmem:[%s1 + $0x48] sm:$0xff]
    %v57 = vld [vmem:[%s1 + $0x50] sm:$0xff]
    %v58 = vld [vmem:[%s1 + $0x58] sm:$0xff]
    %vm59 = vcmask 261120
    %v61 = vsel %vm59, %v43, 0
    %v64 = vsel %vm59, %v44, 0
    %v67 = vsel %vm59, %v45, 0
    %v70 = vsel %vm59, %v46, 0
    %72 = vmatpush.msra.mxu0 0.0
    %73 = vmatpush.msra.mxu0 0.0
    %74 = vmatpush.msra.mxu0 0.0
    %75 = vmatpush.msra.mxu0 0.0
    %76 = vmatpush.msra.mxu0 0.0
    %77 = vmatpush.msra.mxu0 0.0
    %78 = vmatpush.msra.mxu0 0.0
    %79 = vmatpush.msra.mxu0 0.0
    %80 = vmatpush.msra.mxu0 0.0
    %81 = vmatpush.msra.mxu0 0.0
    %82 = vmatpush.msra.mxu0 0.0
    %83 = vmatpush.msra.mxu0 0.0
    %84 = vmatpush.msra.mxu0 %v56
    %85 = vmatpush.msra.mxu0 %v53
    %86 = vmatpush.msra.mxu0 %v50
    %87 = vmatpush.msra.mxu0 %v47
    %88 = vmatmul.f32.gmra.mxu0 %v61
    %v89 = vpop.f32.mrf.mxu0
    %v90 = vadd.f32 0.0, %v89
    %91 = vmatmul.f32.gmra.mxu0 %v64
    %v92 = vpop.f32.mrf.mxu0
    %v93 = vadd.f32 0.0, %v92
    %94 = vmatmul.f32.gmra.mxu0 %v67
    %v95 = vpop.f32.mrf.mxu0
    %v96 = vadd.f32 0.0, %v95
    %97 = vmatmul.f32.gmra.mxu0 %v70
    %v98 = vpop.f32.mrf.mxu0
    %v99 = vadd.f32 0.0, %v98
    %100 = vdwg.mxu0
    %101 = vmatpush.msra.mxu0 0.0
    %102 = vmatpush.msra.mxu0 0.0
    %103 = vmatpush.msra.mxu0 0.0
    %104 = vmatpush.msra.mxu0 0.0
    %105 = vmatpush.msra.mxu0 0.0
    %106 = vmatpush.msra.mxu0 0.0
    %107 = vmatpush.msra.mxu0 0.0
    %108 = vmatpush.msra.mxu0 0.0
    %109 = vmatpush.msra.mxu0 0.0
    %110 = vmatpush.msra.mxu0 0.0
    %111 = vmatpush.msra.mxu0 0.0
    %112 = vmatpush.msra.mxu0 0.0
    %113 = vmatpush.msra.mxu0 %v57
    %114 = vmatpush.msra.mxu0 %v54
    %115 = vmatpush.msra.mxu0 %v51
    %116 = vmatpush.msra.mxu0 %v48
    %117 = vmatmul.f32.gmra.mxu0 %v61
    %v118 = vpop.f32.mrf.mxu0
    %v119 = vadd.f32 0.0, %v118
    %120 = vmatmul.f32.gmra.mxu0 %v64
    %v121 = vpop.f32.mrf.mxu0
    %v122 = vadd.f32 0.0, %v121
    %123 = vmatmul.f32.gmra.mxu0 %v67
    %v124 = vpop.f32.mrf.mxu0
    %v125 = vadd.f32 0.0, %v124
    %126 = vmatmul.f32.gmra.mxu0 %v70
    %v127 = vpop.f32.mrf.mxu0
    %v128 = vadd.f32 0.0, %v127
    %129 = vdwg.mxu0
    %130 = vmatpush.msra.mxu0 0.0
    %131 = vmatpush.msra.mxu0 0.0
    %132 = vmatpush.msra.mxu0 0.0
    %133 = vmatpush.msra.mxu0 0.0
    %134 = vmatpush.msra.mxu0 0.0
    %135 = vmatpush.msra.mxu0 0.0
    %136 = vmatpush.msra.mxu0 0.0
    %137 = vmatpush.msra.mxu0 0.0
    %138 = vmatpush.msra.mxu0 0.0
    %139 = vmatpush.msra.mxu0 0.0
    %140 = vmatpush.msra.mxu0 0.0
    %141 = vmatpush.msra.mxu0 0.0
    %142 = vmatpush.msra.mxu0 %v58
    %143 = vmatpush.msra.mxu0 %v55
    %144 = vmatpush.msra.mxu0 %v52
    %145 = vmatpush.msra.mxu0 %v49
    %146 = vmatmul.f32.gmra.mxu0 %v61
    %v147 = vpop.f32.mrf.mxu0
    %v148 = vadd.f32 0.0, %v147
    %149 = vmatmul.f32.gmra.mxu0 %v64
    %v150 = vpop.f32.mrf.mxu0
    %v151 = vadd.f32 0.0, %v150
    %152 = vmatmul.f32.gmra.mxu0 %v67
    %v153 = vpop.f32.mrf.mxu0
    %v154 = vadd.f32 0.0, %v153
    %155 = vmatmul.f32.gmra.mxu0 %v70
    %v156 = vpop.f32.mrf.mxu0
    %v157 = vadd.f32 0.0, %v156
    %158 = vdwg.mxu0
    %v159 = vld [vmem:[%s3] sm:$0xff]
    %v160 = vld [vmem:[%s3 + $0x8] sm:$0xff]
    %v161 = vld [vmem:[%s3 + $0x10] sm:$0xff]
    %v162 = vld [vmem:[%s3 + $0x18] sm:$0xff]
    %v163 = vld [vmem:[%s2] sm:$0x1]
    %v164 = vld [vmem:[#allocation2] sm:$0xff]
    %v165 = vld [vmem:[#allocation2 + $0x20] sm:$0xff]
    %v166 = vld [vmem:[#allocation2 + $0x40] sm:$0xff]
    %v167 = vld [vmem:[#allocation2 + $0x60] sm:$0xff]
    %v168 = vld [vmem:[#allocation2 + $0x80] sm:$0xff]
    %v169 = vld [vmem:[#allocation2 + $0xa0] sm:$0xff]
    %v170 = vld [vmem:[#allocation2 + $0xc0] sm:$0xff]
    %v171 = vld [vmem:[#allocation2 + $0xe0] sm:$0xff]
    %v172 = vld [vmem:[#allocation2 + $0x100] sm:$0xff]
    %v173 = vld [vmem:[#allocation2 + $0x120] sm:$0xff]
    %v174 = vld [vmem:[#allocation2 + $0x140] sm:$0xff]
    %v175 = vld [vmem:[#allocation2 + $0x160] sm:$0xff]
    %v176 = vld [vmem:[#allocation2 + $0x180] sm:$0xff]
    %v177 = vld [vmem:[#allocation2 + $0x1a0] sm:$0xff]
    %v178 = vld [vmem:[#allocation2 + $0x1c0] sm:$0xff]
    %v179 = vld [vmem:[#allocation2 + $0x1e0] sm:$0xff]
    %v180 = vld [vmem:[#allocation2 + $0x8] sm:$0xff]
    %v181 = vld [vmem:[#allocation2 + $0x28] sm:$0xff]
    %v182 = vld [vmem:[#allocation2 + $0x48] sm:$0xff]
    %v183 = vld [vmem:[#allocation2 + $0x68] sm:$0xff]
    %v184 = vld [vmem:[#allocation2 + $0x88] sm:$0xff]
    %v185 = vld [vmem:[#allocation2 + $0xa8] sm:$0xff]
    %v186 = vld [vmem:[#allocation2 + $0xc8] sm:$0xff]
    %v187 = vld [vmem:[#allocation2 + $0xe8] sm:$0xff]
    %v188 = vld [vmem:[#allocation2 + $0x108] sm:$0xff]
    %v189 = vld [vmem:[#allocation2 + $0x128] sm:$0xff]
    %v190 = vld [vmem:[#allocation2 + $0x148] sm:$0xff]
    %v191 = vld [vmem:[#allocation2 + $0x168] sm:$0xff]
    %v192 = vld [vmem:[#allocation2 + $0x188] sm:$0xff]
    %v193 = vld [vmem:[#allocation2 + $0x1a8] sm:$0xff]
    %v194 = vld [vmem:[#allocation2 + $0x1c8] sm:$0xff]
    %v195 = vld [vmem:[#allocation2 + $0x1e8] sm:$0xff]
    %v196 = vld [vmem:[#allocation2 + $0x10] sm:$0xff]
    %v197 = vld [vmem:[#allocation2 + $0x30] sm:$0xff]
    %v198 = vld [vmem:[#allocation2 + $0x50] sm:$0xff]
    %v199 = vld [vmem:[#allocation2 + $0x70] sm:$0xff]
    %v200 = vld [vmem:[#allocation2 + $0x90] sm:$0xff]
    %v201 = vld [vmem:[#allocation2 + $0xb0] sm:$0xff]
    %v202 = vld [vmem:[#allocation2 + $0xd0] sm:$0xff]
    %v203 = vld [vmem:[#allocation2 + $0xf0] sm:$0xff]
    %v204 = vld [vmem:[#allocation2 + $0x110] sm:$0xff]
    %v205 = vld [vmem:[#allocation2 + $0x130] sm:$0xff]
    %v206 = vld [vmem:[#allocation2 + $0x150] sm:$0xff]
    %v207 = vld [vmem:[#allocation2 + $0x170] sm:$0xff]
    %v208 = vld [vmem:[#allocation2 + $0x190] sm:$0xff]
    %v209 = vld [vmem:[#allocation2 + $0x1b0] sm:$0xff]
    %v210 = vld [vmem:[#allocation2 + $0x1d0] sm:$0xff]
    %v211 = vld [vmem:[#allocation2 + $0x1f0] sm:$0xff]
    %v212 = vld [vmem:[#allocation2 + $0x18] sm:$0xff]
    %v213 = vld [vmem:[#allocation2 + $0x38] sm:$0xff]
    %v214 = vld [vmem:[#allocation2 + $0x58] sm:$0xff]
    %v215 = vld [vmem:[#allocation2 + $0x78] sm:$0xff]
    %v216 = vld [vmem:[#allocation2 + $0x98] sm:$0xff]
    %v217 = vld [vmem:[#allocation2 + $0xb8] sm:$0xff]
    %v218 = vld [vmem:[#allocation2 + $0xd8] sm:$0xff]
    %v219 = vld [vmem:[#allocation2 + $0xf8] sm:$0xff]
    %v220 = vld [vmem:[#allocation2 + $0x118] sm:$0xff]
    %v221 = vld [vmem:[#allocation2 + $0x138] sm:$0xff]
    %v222 = vld [vmem:[#allocation2 + $0x158] sm:$0xff]
    %v223 = vld [vmem:[#allocation2 + $0x178] sm:$0xff]
    %v224 = vld [vmem:[#allocation2 + $0x198] sm:$0xff]
    %v225 = vld [vmem:[#allocation2 + $0x1b8] sm:$0xff]
    %v226 = vld [vmem:[#allocation2 + $0x1d8] sm:$0xff]
    %v227 = vld [vmem:[#allocation2 + $0x1f8] sm:$0xff]
    %228 = vxpose.xlu0.b32.start [1/16] %v119, 128
    %229 = vxpose.xlu0.b32.cont [2/16] %v122, 128
    %230 = vxpose.xlu0.b32.cont [3/16] 0.0, 128
    %231 = vxpose.xlu0.b32.cont [4/16] 0.0, 128
    %232 = vxpose.xlu0.b32.cont [5/16] 0.0, 128
    %233 = vxpose.xlu0.b32.cont [6/16] 0.0, 128
    %234 = vxpose.xlu0.b32.cont [7/16] 0.0, 128
    %235 = vxpose.xlu0.b32.cont [8/16] 0.0, 128
    %236 = vxpose.xlu0.b32.cont [9/16] 0.0, 128
    %237 = vxpose.xlu0.b32.cont [10/16] 0.0, 128
    %238 = vxpose.xlu0.b32.cont [11/16] 0.0, 128
    %239 = vxpose.xlu0.b32.cont [12/16] 0.0, 128
    %240 = vxpose.xlu0.b32.cont [13/16] 0.0, 128
    %241 = vxpose.xlu0.b32.cont [14/16] 0.0, 128
    %242 = vxpose.xlu0.b32.cont [15/16] 0.0, 128
    %243 = vxpose.xlu0.b32.end [16/16] 0.0, 128
    %v244 = vpop.trf.xlu0
    %v245 = vpop.trf.xlu0
    %v246 = vpop.trf.xlu0
    %v247 = vpop.trf.xlu0
    %v248 = vpop.trf.xlu0
    %v249 = vpop.trf.xlu0
    %v250 = vpop.trf.xlu0
    %v251 = vpop.trf.xlu0
    %v252 = vpop.trf.xlu0
    %v253 = vpop.trf.xlu0
    %v254 = vpop.trf.xlu0
    %v255 = vpop.trf.xlu0
    %v256 = vpop.trf.xlu0
    %v257 = vpop.trf.xlu0
    %v258 = vpop.trf.xlu0
    %v259 = vpop.trf.xlu0
    %vm260 = vcmask 130048
    %v262 = vsel %vm260, %v244, 0
    %v265 = vsel %vm260, %v245, 0
    %v268 = vsel %vm260, %v246, 0
    %v271 = vsel %vm260, %v247, 0
    %v274 = vsel %vm260, %v248, 0
    %v277 = vsel %vm260, %v249, 0
    %v280 = vsel %vm260, %v250, 0
    %v283 = vsel %vm260, %v251, 0
    %v286 = vsel %vm260, %v252, 0
    %v289 = vsel %vm260, %v253, 0
    %v292 = vsel %vm260, %v254, 0
    %v295 = vsel %vm260, %v255, 0
    %v298 = vsel %vm260, %v256, 0
    %v301 = vsel %vm260, %v257, 0
    %v304 = vsel %vm260, %v258, 0
    %v307 = vsel %vm260, %v259, 0
    %309 = vmatpush.msra.mxu0 0.0
    %310 = vmatpush.msra.mxu0 0.0
    %311 = vmatpush.msra.mxu0 0.0
    %312 = vmatpush.msra.mxu0 0.0
    %313 = vmatpush.msra.mxu0 0.0
    %314 = vmatpush.msra.mxu0 0.0
    %315 = vmatpush.msra.mxu0 0.0
    %316 = vmatpush.msra.mxu0 0.0
    %317 = vmatpush.msra.mxu0 0.0
    %318 = vmatpush.msra.mxu0 0.0
    %319 = vmatpush.msra.mxu0 0.0
    %320 = vmatpush.msra.mxu0 0.0
    %321 = vmatpush.msra.mxu0 0.0
    %322 = vmatpush.msra.mxu0 0.0
    %323 = vmatpush.msra.mxu0 %v162
    %324 = vmatpush.msra.mxu0 %v161
    %325 = vmatmul.f32.gmra.mxu0 %v262
    %v326 = vpop.f32.mrf.mxu0
    %v327 = vadd.f32 0.0, %v326
    %328 = vmatmul.f32.gmra.mxu0 %v265
    %v329 = vpop.f32.mrf.mxu0
    %v330 = vadd.f32 0.0, %v329
    %331 = vmatmul.f32.gmra.mxu0 %v268
    %v332 = vpop.f32.mrf.mxu0
    %v333 = vadd.f32 0.0, %v332
    %334 = vmatmul.f32.gmra.mxu0 %v271
    %v335 = vpop.f32.mrf.mxu0
    %v336 = vadd.f32 0.0, %v335
    %337 = vmatmul.f32.gmra.mxu0 %v274
    %v338 = vpop.f32.mrf.mxu0
    %v339 = vadd.f32 0.0, %v338
    %340 = vmatmul.f32.gmra.mxu0 %v277
    %v341 = vpop.f32.mrf.mxu0
    %v342 = vadd.f32 0.0, %v341
    %343 = vmatmul.f32.gmra.mxu0 %v280
    %v344 = vpop.f32.mrf.mxu0
    %v345 = vadd.f32 0.0, %v344
    %346 = vmatmul.f32.gmra.mxu0 %v283
    %v347 = vpop.f32.mrf.mxu0
    %v348 = vadd.f32 0.0, %v347
    %349 = vmatmul.f32.gmra.mxu0 %v286
    %v350 = vpop.f32.mrf.mxu0
    %v351 = vadd.f32 0.0, %v350
    %352 = vmatmul.f32.gmra.mxu0 %v289
    %v353 = vpop.f32.mrf.mxu0
    %v354 = vadd.f32 0.0, %v353
    %355 = vmatmul.f32.gmra.mxu0 %v292
    %v356 = vpop.f32.mrf.mxu0
    %v357 = vadd.f32 0.0, %v356
    %358 = vmatmul.f32.gmra.mxu0 %v295
    %v359 = vpop.f32.mrf.mxu0
    %v360 = vadd.f32 0.0, %v359
    %361 = vmatmul.f32.gmra.mxu0 %v298
    %v362 = vpop.f32.mrf.mxu0
    %v363 = vadd.f32 0.0, %v362
    %364 = vmatmul.f32.gmra.mxu0 %v301
    %v365 = vpop.f32.mrf.mxu0
    %v366 = vadd.f32 0.0, %v365
    %367 = vmatmul.f32.gmra.mxu0 %v304
    %v368 = vpop.f32.mrf.mxu0
    %v369 = vadd.f32 0.0, %v368
    %370 = vmatmul.f32.gmra.mxu0 %v307
    %v371 = vpop.f32.mrf.mxu0
    %v372 = vadd.f32 0.0, %v371
    %373 = vdwg.mxu0
    %v374 = vmul.f32 %v327, %v164
    %v375 = vmul.f32 %v330, %v165
    %v376 = vmul.f32 %v333, %v166
    %v377 = vmul.f32 %v336, %v167
    %v378 = vmul.f32 %v339, %v168
    %v379 = vmul.f32 %v342, %v169
    %v380 = vmul.f32 %v345, %v170
    %v381 = vmul.f32 %v348, %v171
    %v382 = vmul.f32 %v351, %v172
    %v383 = vmul.f32 %v354, %v173
    %v384 = vmul.f32 %v357, %v174
    %v385 = vmul.f32 %v360, %v175
    %v386 = vmul.f32 %v363, %v176
    %v387 = vmul.f32 %v366, %v177
    %v388 = vmul.f32 %v369, %v178
    %v389 = vmul.f32 %v372, %v179
    %390 = vmatpush.msra.mxu0 %v389
    %391 = vmatpush.msra.mxu0 %v388
    %392 = vmatpush.msra.mxu0 %v387
    %393 = vmatpush.msra.mxu0 %v386
    %394 = vmatpush.msra.mxu0 %v385
    %395 = vmatpush.msra.mxu0 %v384
    %396 = vmatpush.msra.mxu0 %v383
    %397 = vmatpush.msra.mxu0 %v382
    %398 = vmatpush.msra.mxu0 %v381
    %399 = vmatpush.msra.mxu0 %v380
    %400 = vmatpush.msra.mxu0 %v379
    %401 = vmatpush.msra.mxu0 %v378
    %402 = vmatpush.msra.mxu0 %v377
    %403 = vmatpush.msra.mxu0 %v376
    %404 = vmatpush.msra.mxu0 %v375
    %405 = vmatpush.msra.mxu0 %v374
    %406 = vmatmul.f32.gmra.mxu0 %v90
    %v407 = vpop.f32.mrf.mxu0
    %v408 = vadd.f32 %v159, %v407
    %409 = vmatmul.f32.gmra.mxu0 %v93
    %v410 = vpop.f32.mrf.mxu0
    %v411 = vadd.f32 %v160, %v410
    %412 = vdwg.mxu0
    %413 = vmax.xlane.f32.xlu0 %v408
    %v414 = vpop.xlane.xlu0 %413
    %415 = vmax.xlane.f32.xlu0 %v411
    %v416 = vpop.xlane.xlu0 %415
    %v417 = vsub.f32 %v408, %v414
    %v418 = vsub.f32 %v411, %v416
    %v419 = vmul.f32 %v417, 1.442695
    %v420 = vpow.pop %v419
    %v421 = vmul.f32 %v418, 1.442695
    %v422 = vpow.pop %v421
    %423 = vmatpush.msra.mxu0 %v211
    %424 = vmatpush.msra.mxu0 %v210
    %425 = vmatpush.msra.mxu0 %v209
    %426 = vmatpush.msra.mxu0 %v208
    %427 = vmatpush.msra.mxu0 %v207
    %428 = vmatpush.msra.mxu0 %v206
    %429 = vmatpush.msra.mxu0 %v205
    %430 = vmatpush.msra.mxu0 %v204
    %431 = vmatpush.msra.mxu0 %v203
    %432 = vmatpush.msra.mxu0 %v202
    %433 = vmatpush.msra.mxu0 %v201
    %434 = vmatpush.msra.mxu0 %v200
    %435 = vmatpush.msra.mxu0 %v199
    %436 = vmatpush.msra.mxu0 %v198
    %437 = vmatpush.msra.mxu0 %v197
    %438 = vmatpush.msra.mxu0 %v196
    %439 = vmatmul.f32.gmra.mxu0 %v420
    %v440 = vpop.f32.mrf.mxu0
    %v441 = vadd.f32 0.0, %v440
    %442 = vmatmul.f32.gmra.mxu0 %v422
    %v443 = vpop.f32.mrf.mxu0
    %v444 = vadd.f32 0.0, %v443
    %445 = vdwg.mxu0
    %v446 = vrcp.pop %v441
    %v447 = vmul.f32 %v441, %v446
    %v448 = vsub.f32 1.0, %v447
    %v449 = vmul.f32 %v446, %v448
    %v450 = vadd.f32 %v446, %v449
    %vm451 = vweird.f32 %v441
    %vm452 = vweird.f32 %v446
    %vm453 = vmor %vm451, %vm452
    %v454 = vsel %vm453, %v446, %v450
    %v455 = vand.u32 2147483647, %v441
    %vm456 = vcmp.eq.f32.partialorder %v455, 8.507059e+37
    %v457 = vand.u32 %v441, 2147483648
    %v458 = vor.u32 1.1754944e-38, %v457
    %v459 = vsel %vm456, %v458, %v454
    %v460 = vmul.f32 %v420, %v459
    %v461 = vrcp.pop %v444
    %v462 = vmul.f32 %v444, %v461
    %v463 = vsub.f32 1.0, %v462
    %v464 = vmul.f32 %v461, %v463
    %v465 = vadd.f32 %v461, %v464
    %vm466 = vweird.f32 %v444
    %vm467 = vweird.f32 %v461
    %vm468 = vmor %vm466, %vm467
    %v469 = vsel %vm468, %v461, %v465
    %v470 = vand.u32 2147483647, %v444
    %vm471 = vcmp.eq.f32.partialorder %v470, 8.507059e+37
    %v472 = vand.u32 %v444, 2147483648
    %v473 = vor.u32 1.1754944e-38, %v472
    %v474 = vsel %vm471, %v473, %v469
    %v475 = vmul.f32 %v422, %v474
    %v477 = vperm.slane %v163, 0
    %v479 = vmul.f32 %v460, %v477
    %v480 = vmul.f32 %v475, %v477
    %v481 = vmul.f32 %v148, %v180
    %v482 = vmul.f32 %v151, %v181
    %v483 = vmul.f32 %v148, %v182
    %v484 = vmul.f32 %v151, %v183
    %v485 = vmul.f32 %v148, %v184
    %v486 = vmul.f32 %v151, %v185
    %v487 = vmul.f32 %v148, %v186
    %v488 = vmul.f32 %v151, %v187
    %v489 = vmul.f32 %v148, %v188
    %v490 = vmul.f32 %v151, %v189
    %v491 = vmul.f32 %v148, %v190
    %v492 = vmul.f32 %v151, %v191
    %v493 = vmul.f32 %v148, %v192
    %v494 = vmul.f32 %v151, %v193
    %v495 = vmul.f32 %v148, %v194
    %v496 = vmul.f32 %v151, %v195
    %497 = vmatpush.msra.mxu0 %v496
    %498 = vmatpush.msra.mxu0 %v495
    %499 = vmatpush.msra.mxu0 %v494
    %500 = vmatpush.msra.mxu0 %v493
    %501 = vmatpush.msra.mxu0 %v492
    %502 = vmatpush.msra.mxu0 %v491
    %503 = vmatpush.msra.mxu0 %v490
    %504 = vmatpush.msra.mxu0 %v489
    %505 = vmatpush.msra.mxu0 %v488
    %506 = vmatpush.msra.mxu0 %v487
    %507 = vmatpush.msra.mxu0 %v486
    %508 = vmatpush.msra.mxu0 %v485
    %509 = vmatpush.msra.mxu0 %v484
    %510 = vmatpush.msra.mxu0 %v483
    %511 = vmatpush.msra.mxu0 %v482
    %512 = vmatpush.msra.mxu0 %v481
    %513 = vmatmul.f32.gmra.mxu0 %v479
    %v514 = vpop.f32.mrf.mxu0
    %v515 = vadd.f32 0.0, %v514
    %516 = vmatmul.f32.gmra.mxu0 %v480
    %v517 = vpop.f32.mrf.mxu0
    %v518 = vadd.f32 0.0, %v517
    %519 = vdwg.mxu0
    %520 = vxpose.xlu0.b32.start [1/16] %v125, 128
    %521 = vxpose.xlu0.b32.cont [2/16] %v128, 128
    %522 = vxpose.xlu0.b32.cont [3/16] 0.0, 128
    %523 = vxpose.xlu0.b32.cont [4/16] 0.0, 128
    %524 = vxpose.xlu0.b32.cont [5/16] 0.0, 128
    %525 = vxpose.xlu0.b32.cont [6/16] 0.0, 128
    %526 = vxpose.xlu0.b32.cont [7/16] 0.0, 128
    %527 = vxpose.xlu0.b32.cont [8/16] 0.0, 128
    %528 = vxpose.xlu0.b32.cont [9/16] 0.0, 128
    %529 = vxpose.xlu0.b32.cont [10/16] 0.0, 128
    %530 = vxpose.xlu0.b32.cont [11/16] 0.0, 128
    %531 = vxpose.xlu0.b32.cont [12/16] 0.0, 128
    %532 = vxpose.xlu0.b32.cont [13/16] 0.0, 128
    %533 = vxpose.xlu0.b32.cont [14/16] 0.0, 128
    %534 = vxpose.xlu0.b32.cont [15/16] 0.0, 128
    %535 = vxpose.xlu0.b32.end [16/16] 0.0, 128
    %v536 = vpop.trf.xlu0
    %v537 = vpop.trf.xlu0
    %v538 = vpop.trf.xlu0
    %v539 = vpop.trf.xlu0
    %v540 = vpop.trf.xlu0
    %v541 = vpop.trf.xlu0
    %v542 = vpop.trf.xlu0
    %v543 = vpop.trf.xlu0
    %v544 = vpop.trf.xlu0
    %v545 = vpop.trf.xlu0
    %v546 = vpop.trf.xlu0
    %v547 = vpop.trf.xlu0
    %v548 = vpop.trf.xlu0
    %v549 = vpop.trf.xlu0
    %v550 = vpop.trf.xlu0
    %v551 = vpop.trf.xlu0
    %v553 = vsel %vm260, %v536, 0
    %v556 = vsel %vm260, %v537, 0
    %v559 = vsel %vm260, %v538, 0
    %v562 = vsel %vm260, %v539, 0
    %v565 = vsel %vm260, %v540, 0
    %v568 = vsel %vm260, %v541, 0
    %v571 = vsel %vm260, %v542, 0
    %v574 = vsel %vm260, %v543, 0
    %v577 = vsel %vm260, %v544, 0
    %v580 = vsel %vm260, %v545, 0
    %v583 = vsel %vm260, %v546, 0
    %v586 = vsel %vm260, %v547, 0
    %v589 = vsel %vm260, %v548, 0
    %v592 = vsel %vm260, %v549, 0
    %v595 = vsel %vm260, %v550, 0
    %v598 = vsel %vm260, %v551, 0
    %600 = vmatpush.msra.mxu0 0.0
    %601 = vmatpush.msra.mxu0 0.0
    %602 = vmatpush.msra.mxu0 0.0
    %603 = vmatpush.msra.mxu0 0.0
    %604 = vmatpush.msra.mxu0 0.0
    %605 = vmatpush.msra.mxu0 0.0
    %606 = vmatpush.msra.mxu0 0.0
    %607 = vmatpush.msra.mxu0 0.0
    %608 = vmatpush.msra.mxu0 0.0
    %609 = vmatpush.msra.mxu0 0.0
    %610 = vmatpush.msra.mxu0 0.0
    %611 = vmatpush.msra.mxu0 0.0
    %612 = vmatpush.msra.mxu0 0.0
    %613 = vmatpush.msra.mxu0 0.0
    %614 = vmatpush.msra.mxu0 %v162
    %615 = vmatpush.msra.mxu0 %v161
    %616 = vmatmul.f32.gmra.mxu0 %v553
    %v617 = vpop.f32.mrf.mxu0
    %v618 = vadd.f32 0.0, %v617
    %619 = vmatmul.f32.gmra.mxu0 %v556
    %v620 = vpop.f32.mrf.mxu0
    %v621 = vadd.f32 0.0, %v620
    %622 = vmatmul.f32.gmra.mxu0 %v559
    %v623 = vpop.f32.mrf.mxu0
    %v624 = vadd.f32 0.0, %v623
    %625 = vmatmul.f32.gmra.mxu0 %v562
    %v626 = vpop.f32.mrf.mxu0
    %v627 = vadd.f32 0.0, %v626
    %628 = vmatmul.f32.gmra.mxu0 %v565
    %v629 = vpop.f32.mrf.mxu0
    %v630 = vadd.f32 0.0, %v629
    %631 = vmatmul.f32.gmra.mxu0 %v568
    %v632 = vpop.f32.mrf.mxu0
    %v633 = vadd.f32 0.0, %v632
    %634 = vmatmul.f32.gmra.mxu0 %v571
    %v635 = vpop.f32.mrf.mxu0
    %v636 = vadd.f32 0.0, %v635
    %637 = vmatmul.f32.gmra.mxu0 %v574
    %v638 = vpop.f32.mrf.mxu0
    %v639 = vadd.f32 0.0, %v638
    %640 = vmatmul.f32.gmra.mxu0 %v577
    %v641 = vpop.f32.mrf.mxu0
    %v642 = vadd.f32 0.0, %v641
    %643 = vmatmul.f32.gmra.mxu0 %v580
    %v644 = vpop.f32.mrf.mxu0
    %v645 = vadd.f32 0.0, %v644
    %646 = vmatmul.f32.gmra.mxu0 %v583
    %v647 = vpop.f32.mrf.mxu0
    %v648 = vadd.f32 0.0, %v647
    %649 = vmatmul.f32.gmra.mxu0 %v586
    %v650 = vpop.f32.mrf.mxu0
    %v651 = vadd.f32 0.0, %v650
    %652 = vmatmul.f32.gmra.mxu0 %v589
    %v653 = vpop.f32.mrf.mxu0
    %v654 = vadd.f32 0.0, %v653
    %655 = vmatmul.f32.gmra.mxu0 %v592
    %v656 = vpop.f32.mrf.mxu0
    %v657 = vadd.f32 0.0, %v656
    %658 = vmatmul.f32.gmra.mxu0 %v595
    %v659 = vpop.f32.mrf.mxu0
    %v660 = vadd.f32 0.0, %v659
    %661 = vmatmul.f32.gmra.mxu0 %v598
    %v662 = vpop.f32.mrf.mxu0
    %v663 = vadd.f32 0.0, %v662
    %664 = vdwg.mxu0
    %v665 = vmul.f32 %v618, %v164
    %v666 = vmul.f32 %v621, %v165
    %v667 = vmul.f32 %v624, %v166
    %v668 = vmul.f32 %v627, %v167
    %v669 = vmul.f32 %v630, %v168
    %v670 = vmul.f32 %v633, %v169
    %v671 = vmul.f32 %v636, %v170
    %v672 = vmul.f32 %v639, %v171
    %v673 = vmul.f32 %v642, %v172
    %v674 = vmul.f32 %v645, %v173
    %v675 = vmul.f32 %v648, %v174
    %v676 = vmul.f32 %v651, %v175
    %v677 = vmul.f32 %v654, %v176
    %v678 = vmul.f32 %v657, %v177
    %v679 = vmul.f32 %v660, %v178
    %v680 = vmul.f32 %v663, %v179
    %681 = vmatpush.msra.mxu0 %v680
    %682 = vmatpush.msra.mxu0 %v679
    %683 = vmatpush.msra.mxu0 %v678
    %684 = vmatpush.msra.mxu0 %v677
    %685 = vmatpush.msra.mxu0 %v676
    %686 = vmatpush.msra.mxu0 %v675
    %687 = vmatpush.msra.mxu0 %v674
    %688 = vmatpush.msra.mxu0 %v673
    %689 = vmatpush.msra.mxu0 %v672
    %690 = vmatpush.msra.mxu0 %v671
    %691 = vmatpush.msra.mxu0 %v670
    %692 = vmatpush.msra.mxu0 %v669
    %693 = vmatpush.msra.mxu0 %v668
    %694 = vmatpush.msra.mxu0 %v667
    %695 = vmatpush.msra.mxu0 %v666
    %696 = vmatpush.msra.mxu0 %v665
    %697 = vmatmul.f32.gmra.mxu0 %v96
    %v698 = vpop.f32.mrf.mxu0
    %v699 = vadd.f32 %v159, %v698
    %700 = vmatmul.f32.gmra.mxu0 %v99
    %v701 = vpop.f32.mrf.mxu0
    %v702 = vadd.f32 %v160, %v701
    %703 = vdwg.mxu0
    %704 = vmax.xlane.f32.xlu0 %v699
    %v705 = vpop.xlane.xlu0 %704
    %706 = vmax.xlane.f32.xlu0 %v702
    %v707 = vpop.xlane.xlu0 %706
    %v708 = vsub.f32 %v699, %v705
    %v709 = vsub.f32 %v702, %v707
    %v710 = vmul.f32 %v708, 1.442695
    %v711 = vpow.pop %v710
    %v712 = vmul.f32 %v709, 1.442695
    %v713 = vpow.pop %v712
    %714 = vmatpush.msra.mxu0 %v211
    %715 = vmatpush.msra.mxu0 %v210
    %716 = vmatpush.msra.mxu0 %v209
    %717 = vmatpush.msra.mxu0 %v208
    %718 = vmatpush.msra.mxu0 %v207
    %719 = vmatpush.msra.mxu0 %v206
    %720 = vmatpush.msra.mxu0 %v205
    %721 = vmatpush.msra.mxu0 %v204
    %722 = vmatpush.msra.mxu0 %v203
    %723 = vmatpush.msra.mxu0 %v202
    %724 = vmatpush.msra.mxu0 %v201
    %725 = vmatpush.msra.mxu0 %v200
    %726 = vmatpush.msra.mxu0 %v199
    %727 = vmatpush.msra.mxu0 %v198
    %728 = vmatpush.msra.mxu0 %v197
    %729 = vmatpush.msra.mxu0 %v196
    %730 = vmatmul.f32.gmra.mxu0 %v711
    %v731 = vpop.f32.mrf.mxu0
    %v732 = vadd.f32 0.0, %v731
    %733 = vmatmul.f32.gmra.mxu0 %v713
    %v734 = vpop.f32.mrf.mxu0
    %v735 = vadd.f32 0.0, %v734
    %736 = vdwg.mxu0
    %v737 = vrcp.pop %v732
    %v738 = vmul.f32 %v732, %v737
    %v739 = vsub.f32 1.0, %v738
    %v740 = vmul.f32 %v737, %v739
    %v741 = vadd.f32 %v737, %v740
    %vm742 = vweird.f32 %v732
    %vm743 = vweird.f32 %v737
    %vm744 = vmor %vm742, %vm743
    %v745 = vsel %vm744, %v737, %v741
    %v746 = vand.u32 2147483647, %v732
    %vm747 = vcmp.eq.f32.partialorder %v746, 8.507059e+37
    %v748 = vand.u32 %v732, 2147483648
    %v749 = vor.u32 1.1754944e-38, %v748
    %v750 = vsel %vm747, %v749, %v745
    %v751 = vmul.f32 %v711, %v750
    %v752 = vrcp.pop %v735
    %v753 = vmul.f32 %v735, %v752
    %v754 = vsub.f32 1.0, %v753
    %v755 = vmul.f32 %v752, %v754
    %v756 = vadd.f32 %v752, %v755
    %vm757 = vweird.f32 %v735
    %vm758 = vweird.f32 %v752
    %vm759 = vmor %vm757, %vm758
    %v760 = vsel %vm759, %v752, %v756
    %v761 = vand.u32 2147483647, %v735
    %vm762 = vcmp.eq.f32.partialorder %v761, 8.507059e+37
    %v763 = vand.u32 %v735, 2147483648
    %v764 = vor.u32 1.1754944e-38, %v763
    %v765 = vsel %vm762, %v764, %v760
    %v766 = vmul.f32 %v713, %v765
    %v767 = vmul.f32 %v751, %v477
    %v768 = vmul.f32 %v766, %v477
    %v769 = vmul.f32 %v154, %v180
    %v770 = vmul.f32 %v157, %v181
    %v771 = vmul.f32 %v154, %v182
    %v772 = vmul.f32 %v157, %v183
    %v773 = vmul.f32 %v154, %v184
    %v774 = vmul.f32 %v157, %v185
    %v775 = vmul.f32 %v154, %v186
    %v776 = vmul.f32 %v157, %v187
    %v777 = vmul.f32 %v154, %v188
    %v778 = vmul.f32 %v157, %v189
    %v779 = vmul.f32 %v154, %v190
    %v780 = vmul.f32 %v157, %v191
    %v781 = vmul.f32 %v154, %v192
    %v782 = vmul.f32 %v157, %v193
    %v783 = vmul.f32 %v154, %v194
    %v784 = vmul.f32 %v157, %v195
    %785 = vmatpush.msra.mxu0 %v784
    %786 = vmatpush.msra.mxu0 %v783
    %787 = vmatpush.msra.mxu0 %v782
    %788 = vmatpush.msra.mxu0 %v781
    %789 = vmatpush.msra.mxu0 %v780
    %790 = vmatpush.msra.mxu0 %v779
    %791 = vmatpush.msra.mxu0 %v778
    %792 = vmatpush.msra.mxu0 %v777
    %793 = vmatpush.msra.mxu0 %v776
    %794 = vmatpush.msra.mxu0 %v775
    %795 = vmatpush.msra.mxu0 %v774
    %796 = vmatpush.msra.mxu0 %v773
    %797 = vmatpush.msra.mxu0 %v772
    %798 = vmatpush.msra.mxu0 %v771
    %799 = vmatpush.msra.mxu0 %v770
    %800 = vmatpush.msra.mxu0 %v769
    %801 = vmatmul.f32.gmra.mxu0 %v767
    %v802 = vpop.f32.mrf.mxu0
    %v803 = vadd.f32 0.0, %v802
    %804 = vmatmul.f32.gmra.mxu0 %v768
    %v805 = vpop.f32.mrf.mxu0
    %v806 = vadd.f32 0.0, %v805
    %807 = vdwg.mxu0
    %808 = vmatpush.msra.mxu0 %v227
    %809 = vmatpush.msra.mxu0 %v226
    %810 = vmatpush.msra.mxu0 %v225
    %811 = vmatpush.msra.mxu0 %v224
    %812 = vmatpush.msra.mxu0 %v223
    %813 = vmatpush.msra.mxu0 %v222
    %814 = vmatpush.msra.mxu0 %v221
    %815 = vmatpush.msra.mxu0 %v220
    %816 = vmatpush.msra.mxu0 %v219
    %817 = vmatpush.msra.mxu0 %v218
    %818 = vmatpush.msra.mxu0 %v217
    %819 = vmatpush.msra.mxu0 %v216
    %820 = vmatpush.msra.mxu0 %v215
    %821 = vmatpush.msra.mxu0 %v214
    %822 = vmatpush.msra.mxu0 %v213
    %823 = vmatpush.msra.mxu0 %v212
    %824 = vmatmul.f32.gmra.mxu0 %v515
    %v825 = vpop.f32.mrf.mxu0
    %v826 = vadd.f32 0.0, %v825
    %827 = vmatmul.f32.gmra.mxu0 %v518
    %v828 = vpop.f32.mrf.mxu0
    %v829 = vadd.f32 0.0, %v828
    %830 = vmatmul.f32.gmra.mxu0 %v803
    %v831 = vpop.f32.mrf.mxu0
    %v832 = vadd.f32 0.0, %v831
    %833 = vmatmul.f32.gmra.mxu0 %v806
    %v834 = vpop.f32.mrf.mxu0
    %v835 = vadd.f32 0.0, %v834
    %836 = vdwg.mxu0
    %v837 = vsub.f32 %v515, %v826
    %v838 = vsub.f32 %v518, %v829
    %v839 = vsub.f32 %v803, %v832
    %v840 = vsub.f32 %v806, %v835
    %v841 = vmul.f32 %v837, %v837
    %v842 = vmul.f32 %v838, %v838
    %v843 = vmul.f32 %v839, %v839
    %v844 = vmul.f32 %v840, %v840
    %845 = vmatpush.msra.mxu0 %v227
    %846 = vmatpush.msra.mxu0 %v226
    %847 = vmatpush.msra.mxu0 %v225
    %848 = vmatpush.msra.mxu0 %v224
    %849 = vmatpush.msra.mxu0 %v223
    %850 = vmatpush.msra.mxu0 %v222
    %851 = vmatpush.msra.mxu0 %v221
    %852 = vmatpush.msra.mxu0 %v220
    %853 = vmatpush.msra.mxu0 %v219
    %854 = vmatpush.msra.mxu0 %v218
    %855 = vmatpush.msra.mxu0 %v217
    %856 = vmatpush.msra.mxu0 %v216
    %857 = vmatpush.msra.mxu0 %v215
    %858 = vmatpush.msra.mxu0 %v214
    %859 = vmatpush.msra.mxu0 %v213
    %860 = vmatpush.msra.mxu0 %v212
    %861 = vmatmul.f32.gmra.mxu0 %v841
    %v862 = vpop.f32.mrf.mxu0
    %v863 = vadd.f32 1e-05, %v862
    %864 = vmatmul.f32.gmra.mxu0 %v842
    %v865 = vpop.f32.mrf.mxu0
    %v866 = vadd.f32 1e-05, %v865
    %867 = vmatmul.f32.gmra.mxu0 %v843
    %v868 = vpop.f32.mrf.mxu0
    %v869 = vadd.f32 1e-05, %v868
    %870 = vmatmul.f32.gmra.mxu0 %v844
    %v871 = vpop.f32.mrf.mxu0
    %v872 = vadd.f32 1e-05, %v871
    %873 = vdwg.mxu0
    %v874 = vrsqrt.pop %v863
    %v875 = vmul.f32 %v874, %v863
    %v876 = vmul.f32 %v875, %v874
    %v877 = vmul.f32 0.5, %v876
    %v878 = vsub.f32 1.5, %v877
    %v879 = vmul.f32 %v874, %v878
    %vm880 = vweird.f32 %v863
    %vm881 = vweird.f32 %v874
    %vm882 = vmor %vm880, %vm881
    %v883 = vsel %vm882, %v874, %v879
    %v884 = vrsqrt.pop %v866
    %v885 = vmul.f32 %v884, %v866
    %v886 = vmul.f32 %v885, %v884
    %v887 = vmul.f32 0.5, %v886
    %v888 = vsub.f32 1.5, %v887
    %v889 = vmul.f32 %v884, %v888
    %vm890 = vweird.f32 %v866
    %vm891 = vweird.f32 %v884
    %vm892 = vmor %vm890, %vm891
    %v893 = vsel %vm892, %v884, %v889
    %v894 = vrsqrt.pop %v869
    %v895 = vmul.f32 %v894, %v869
    %v896 = vmul.f32 %v895, %v894
    %v897 = vmul.f32 0.5, %v896
    %v898 = vsub.f32 1.5, %v897
    %v899 = vmul.f32 %v894, %v898
    %vm900 = vweird.f32 %v869
    %vm901 = vweird.f32 %v894
    %vm902 = vmor %vm900, %vm901
    %v903 = vsel %vm902, %v894, %v899
    %v904 = vrsqrt.pop %v872
    %v905 = vmul.f32 %v904, %v872
    %v906 = vmul.f32 %v905, %v904
    %v907 = vmul.f32 0.5, %v906
    %v908 = vsub.f32 1.5, %v907
    %v909 = vmul.f32 %v904, %v908
    %vm910 = vweird.f32 %v872
    %vm911 = vweird.f32 %v904
    %vm912 = vmor %vm910, %vm911
    %v913 = vsel %vm912, %v904, %v909
    %v914 = vmul.f32 %v837, %v883
    %v915 = vmul.f32 %v838, %v893
    %v916 = vmul.f32 %v839, %v903
    %v917 = vmul.f32 %v840, %v913
    %v918 = vld [vmem:[%s5] sm:$0xff]
    %v919 = vld [vmem:[%s5 + $0x8] sm:$0xff]
    %v920 = vld [vmem:[%s5 + $0x10] sm:$0xff]
    %v921 = vld [vmem:[%s5 + $0x18] sm:$0xff]
    %v922 = vld [vmem:[%s5 + $0x20] sm:$0xff]
    %v923 = vld [vmem:[%s5 + $0x28] sm:$0xff]
    %v924 = vld [vmem:[%s5 + $0x30] sm:$0xff]
    %v925 = vld [vmem:[%s5 + $0x38] sm:$0xff]
    %v926 = vld [vmem:[%s5 + $0x40] sm:$0xff]
    %v927 = vld [vmem:[%s5 + $0x48] sm:$0xff]
    %v928 = vld [vmem:[%s5 + $0x50] sm:$0xff]
    %v929 = vld [vmem:[%s5 + $0x58] sm:$0xff]
    %v930 = vld [vmem:[%s5 + $0x60] sm:$0xff]
    %v931 = vld [vmem:[%s5 + $0x68] sm:$0xff]
    %v932 = vld [vmem:[%s5 + $0x70] sm:$0xff]
    %v933 = vld [vmem:[%s5 + $0x78] sm:$0xff]
    %v934 = vld [vmem:[%s6] sm:$0x1]
    %v936 = vperm.slane %v934, 0
    %938 = vmatpush.msra.mxu0 %v933
    %939 = vmatpush.msra.mxu0 %v932
    %940 = vmatpush.msra.mxu0 %v931
    %941 = vmatpush.msra.mxu0 %v930
    %942 = vmatpush.msra.mxu0 %v929
    %943 = vmatpush.msra.mxu0 %v928
    %944 = vmatpush.msra.mxu0 %v927
    %945 = vmatpush.msra.mxu0 %v926
    %946 = vmatpush.msra.mxu0 %v925
    %947 = vmatpush.msra.mxu0 %v924
    %948 = vmatpush.msra.mxu0 %v923
    %949 = vmatpush.msra.mxu0 %v922
    %950 = vmatpush.msra.mxu0 %v921
    %951 = vmatpush.msra.mxu0 %v920
    %952 = vmatpush.msra.mxu0 %v919
    %953 = vmatpush.msra.mxu0 %v918
    %954 = vmatmul.f32.gmra.mxu0 %v914
    %v955 = vpop.f32.mrf.mxu0
    %v956 = vadd.f32 %v936, %v955
    %957 = vmatmul.f32.gmra.mxu0 %v915
    %v958 = vpop.f32.mrf.mxu0
    %v959 = vadd.f32 %v936, %v958
    %960 = vmatmul.f32.gmra.mxu0 %v916
    %v961 = vpop.f32.mrf.mxu0
    %v962 = vadd.f32 %v936, %v961
    %963 = vmatmul.f32.gmra.mxu0 %v917
    %v964 = vpop.f32.mrf.mxu0
    %v965 = vadd.f32 %v936, %v964
    %966 = vdwg.mxu0
    %967 = vst.msk [vmem:[#allocation5] sm:$0xff] %vm59, %v956
    %968 = vst.msk [vmem:[#allocation5 + $0x8] sm:$0xff] %vm59, %v959
    %969 = vst.msk [vmem:[#allocation5 + $0x10] sm:$0xff] %vm59, %v962
    %970 = vst.msk [vmem:[#allocation5 + $0x18] sm:$0xff] %vm59, %v965
    // Predicated region
    $region34: #{tpu_custom_call.1} parent=1 // pred_check
      _
    $region35: #{tpu_custom_call.1} parent=1 // pred_check_branch
      %972 = sbr.rel (0) target = $region37
    $region36: #{tpu_custom_call.1} parent=1 // pred_region
      %974 = vsyncadd [#allocation4], 0
      %s975 = sshll.u32 [#allocation5], 4
      %s976 = int_to_ptr.vmem [resolvable:$true] %s975
      %s977 = sshll.u32 %s7, 4
      %s978 = int_to_ptr.hbm [resolvable:$true] %s977
      %983 = dma.vmem_to_hbm [thread:$0]  %s976, 512, %s978, [#allocation4], 128, 128, 8
    $region37: #{tpu_custom_call.1} parent=1 // pred_fallthru
      _
    // Predicated region
    $region38: #{tpu_custom_call.1} parent=1 // pred_check
      _
    $region39: #{tpu_custom_call.1} parent=1 // pred_check_branch
      %985 = sbr.rel (0) target = $region41
    $region40: #{tpu_custom_call.1} parent=1 // pred_region
      %987 = dma.done [#allocation4], 512
    $region41: #{tpu_custom_call.1} parent=1 // pred_fallthru
      _
    %988 = vsyncpa [#allocation3], 1
    %989 = vsyncpa [#allocation4], 1

</llo_original>
